<compile_context>
chip_gen: v6e
topology: v6e:2x2x1
jax: 0.10.0
libtpu: 0.0.40
codegen_flags: <defaults>
</compile_context>

<pallas_src>
import numpy as np
import jax
import jax.numpy as jnp
from jax.experimental import pallas as pl
from jax.experimental.pallas import tpu as pltpu


_VMEM = pl.BlockSpec(memory_space=pltpu.MemorySpace.VMEM)
_SMEM = pl.BlockSpec(memory_space=pltpu.MemorySpace.SMEM)


# ----------------------------------------------------------------------------
# Fused Pallas kernels
# ----------------------------------------------------------------------------

def _make_predictor_call(C2, BHW):
    """Fused model + ancestral (predictor) update on the joint state.

    coef (SMEM, (5,)): [sqrt_recip_alphas_bar, sqrt_recipm1_alphas_bar,
                        posterior_mean_coef1, posterior_mean_coef2,
                        exp(0.5*model_log_var) * (t > 0)]
    """
    def kernel(coef_ref, w_ref, bias_ref, xy_ref, noise_ref, out_ref):
        c_recip = coef_ref[0]
        c_recipm1 = coef_ref[1]
        pm1 = coef_ref[2]
        pm2 = coef_ref[3]
        std_mask = coef_ref[4]

        xy = xy_ref[...]                                   # (2C, B*HW)
        # synthetic denoiser: per-pixel channel mix (MXU, lane-dense N=BHW)
        eps = jnp.tanh(
            jnp.dot(w_ref[...], xy, preferred_element_type=jnp.float32)
            + bias_ref[...])
        x0 = c_recip * xy - c_recipm1 * eps                # predict_xstart_from_eps
        mean = pm1 * x0 + pm2 * xy                         # posterior mean
        out_ref[...] = mean + std_mask * noise_ref[...]

    return pl.pallas_call(
        kernel,
        out_shape=jax.ShapeDtypeStruct((C2, BHW), jnp.float32),
        in_specs=[_SMEM, _VMEM, _VMEM, _VMEM, _VMEM],
        out_specs=_VMEM,
        input_output_aliases={3: 0},                       # in-place on xy
    )


def _make_corrector_call(C2, B, HW):
    """Fused model + norms + step size + Langevin corrector update.

    coef (SMEM, (4,)): [recip_std = 1/sqrt(1-alphas_bar), 2*alphas,
                        snr, corrector_mask (0 at t==0)]
    """
    BHW = B * HW

    def kernel(coef_ref, w_ref, bias_ref, xy_ref, z_ref, out_ref):
        recip_std = coef_ref[0]
        two_alpha = coef_ref[1]
        snr = coef_ref[2]
        cmask = coef_ref[3]

        xy = xy_ref[...]                                   # (2C, B*HW)
        z = z_ref[...]
        eps = jnp.tanh(
            jnp.dot(w_ref[...], xy, preferred_element_type=jnp.float32)
            + bias_ref[...])
        g = (-recip_std) * eps                             # score estimate

        # mean over batch of per-sample L2 norms (flattened 2C*HW vectors);
        # columns [b*HW, (b+1)*HW) are the pixels of sample b (lane-aligned
        # static slices, HW is a multiple of 128 at the test size).
        g_norm_sum = jnp.float32(0.0)
        z_norm_sum = jnp.float32(0.0)
        for b in range(B):
            gb = g[:, b * HW:(b + 1) * HW]
            zb = z[:, b * HW:(b + 1) * HW]
            g_norm_sum = g_norm_sum + jnp.sqrt(jnp.sum(gb * gb))
            z_norm_sum = z_norm_sum + jnp.sqrt(jnp.sum(zb * zb))
        g_norm = g_norm_sum / B
        z_norm = z_norm_sum / B

        temp = (snr * z_norm / g_norm) ** 2
        e = two_alpha * temp                               # e = 2*alpha*temp
        # cmask == 0 at t == 0  ->  exact no-op (x + 0)
        out_ref[...] = xy + cmask * (e * g + jnp.sqrt(2.0 * e) * z)

    return pl.pallas_call(
        kernel,
        out_shape=jax.ShapeDtypeStruct((C2, BHW), jnp.float32),
        in_specs=[_SMEM, _VMEM, _VMEM, _VMEM, _VMEM],
        out_specs=_VMEM,
        input_output_aliases={3: 0},                       # in-place on xy
    )


# ----------------------------------------------------------------------------
# Sampler
# ----------------------------------------------------------------------------

class GaussianDiffusionSamplerPallas:
    def __init__(self, beta_1, beta_T, T, n_corrector, snr, C=4):
        self.T = T
        self.n_corrector = n_corrector
        self.snr = float(snr)
        self.C = C

        # buffers computed in float64 (PyTorch registers them as double)
        betas = np.linspace(beta_1, beta_T, T, dtype=np.float64)
        alphas = 1.0 - betas
        alphas_bar = np.cumprod(alphas)
        alphas_bar_prev = np.concatenate([[1.0], alphas_bar[:-1]])

        sqrt_recip_alphas_bar = np.sqrt(1.0 / alphas_bar)
        sqrt_recipm1_alphas_bar = np.sqrt(1.0 / alphas_bar - 1.0)
        sqrt_recip_alphas_bar_m1 = 1.0 / np.sqrt(1.0 - alphas_bar)
        posterior_var = betas * (1.0 - alphas_bar_prev) / (1.0 - alphas_bar)
        posterior_mean_coef1 = (
            np.sqrt(alphas_bar_prev) * betas / (1.0 - alphas_bar))
        posterior_mean_coef2 = (
            np.sqrt(alphas) * (1.0 - alphas_bar_prev) / (1.0 - alphas_bar))
        # var_type == 'fixedlarge'
        model_log_var = np.log(
            np.concatenate([posterior_var[1:2], betas[1:]]))

        # predictor coefficient table (T, 5); noise std pre-masked at t == 0
        std = np.exp(0.5 * model_log_var)
        noise_mask = np.ones(T, dtype=np.float64)
        noise_mask[0] = 0.0
        self.pred_coefs = jnp.asarray(
            np.stack([sqrt_recip_alphas_bar, sqrt_recipm1_alphas_bar,
                      posterior_mean_coef1, posterior_mean_coef2,
                      std * noise_mask], axis=1),
            dtype=jnp.float32)

        # corrector coefficient table (T, 4); masked out at t == 0
        corr_mask = np.ones(T, dtype=np.float64)
        corr_mask[0] = 0.0
        self.corr_coefs = jnp.asarray(
            np.stack([sqrt_recip_alphas_bar_m1, 2.0 * alphas,
                      np.full(T, self.snr, dtype=np.float64), corr_mask],
                     axis=1),
            dtype=jnp.float32)

        # deterministic synthetic denoiser parameters
        C2 = 2 * C
        kW = jax.random.PRNGKey(42)
        self.W = (0.05 * jax.random.normal(kW, (C2, C2))).astype(jnp.float32)
        ts = np.arange(T, dtype=np.float64)[:, None]
        ch = np.arange(1, C2 + 1, dtype=np.float64)[None, :]
        self.t_bias = jnp.asarray(
            0.1 * np.sin((ts + 1.0) * ch), dtype=jnp.float32)[:, :, None]

        self._sampler_cache = {}

    def _get_sampler(self, B, C, H, Wd):
        sig = (B, C, H, Wd)
        if sig in self._sampler_cache:
            return self._sampler_cache[sig]

        C2, HW = 2 * C, H * Wd
        BHW = B * HW
        T = self.T
        n_corr = self.n_corrector

        predictor_call = _make_predictor_call(C2, BHW)
        corrector_call = _make_corrector_call(C2, B, HW)

        def sample(w, t_bias, pred_coefs, corr_coefs, x_T, y_T, key):
            # joint channel-major layout (2C, B*HW): one layout change at
            # entry / exit; no per-step concat/slice/reshape HBM copies.
            xy = jnp.concatenate([x_T, y_T], axis=1).reshape(B, C2, HW)
            xy = xy.transpose(1, 0, 2).reshape(C2, BHW)

            def step(i, carry):
                xy, key = carry
                t = T - 1 - i
                key, kp, kc = jax.random.split(key, 3)
                noise = jax.random.normal(kp, (C2, BHW), jnp.float32)
                xy = predictor_call(pred_coefs[t], w, t_bias[t], xy, noise)
                for _ in range(n_corr):                    # static unroll
                    kc, kz = jax.random.split(kc)
                    z = jax.random.normal(kz, (C2, BHW), jnp.float32)
                    xy = corrector_call(corr_coefs[t], w, t_bias[t], xy, z)
                return xy, key

            xy, _ = jax.lax.fori_loop(0, T, step, (xy, key))

            xy = xy.reshape(C2, B, HW).transpose(1, 0, 2)
            xy = jnp.clip(xy, -1.0, 1.0).reshape(B, C2, H, Wd)
            return xy[:, :C], xy[:, C:]

        fn = jax.jit(sample)
        self._sampler_cache[sig] = fn
        return fn

    # ---- forward: option='joint_gen' (x_0 is None and y_0 is None) ----
    def forward(self, x_T, y_T, key):
        B, C, H, Wd = x_T.shape
        fn = self._get_sampler(B, C, H, Wd)
        return fn(self.W, self.t_bias, self.pred_coefs, self.corr_coefs,
                  x_T, y_T, key)


# ----------------------------------------------------------------------------
if __name__ == "__main__":
    B, C, H, W = 2, 4, 16, 16          # small NCHW shapes
    T = 8
    sampler = GaussianDiffusionSamplerPallas(
        beta_1=1e-4, beta_T=0.02, T=T, n_corrector=1, snr=0.16, C=C)

    key = jax.random.PRNGKey(0)
    kx, ky, kf = jax.random.split(key, 3)
    x_T = jax.random.normal(kx, (B, C, H, W), jnp.float32)
    y_T = jax.random.normal(ky, (B, C, H, W), jnp.float32)

    x_0, y_0 = sampler.forward(x_T, y_T, kf)
    jax.block_until_ready((x_0, y_0))
    assert x_0.shape == (B, C, H, W) and y_0.shape == (B, C, H, W)
    assert bool(jnp.all(jnp.isfinite(x_0))) and bool(jnp.all(jnp.isfinite(y_0)))
    print("KERNEL_OK")
</pallas_src>

<mosaic_0001>
module attributes {stable_mosaic.version = 11 : i64} {
  func.func @kernel(%arg0: memref<4xf32, #tpu.memory_space<smem>>, %arg1: memref<8x8xf32, #tpu.memory_space<vmem>>, %arg2: memref<8x1xf32, #tpu.memory_space<vmem>>, %arg3: memref<8x512xf32, #tpu.memory_space<vmem>>, %arg4: memref<8x512xf32, #tpu.memory_space<vmem>>, %arg5: memref<8x512xf32, #tpu.memory_space<vmem>>) attributes {dimension_semantics = [], scalar_prefetch = 0 : i64, scratch_operands = 0 : i64, tpu.core_type = #tpu.core_type<tc>} {
    %c0 = arith.constant 0 : index
    %0 = memref.load %arg0[%c0] : memref<4xf32, #tpu.memory_space<smem>>
    %c1 = arith.constant 1 : index
    %1 = memref.load %arg0[%c1] : memref<4xf32, #tpu.memory_space<smem>>
    %c2 = arith.constant 2 : index
    %2 = memref.load %arg0[%c2] : memref<4xf32, #tpu.memory_space<smem>>
    %c3 = arith.constant 3 : index
    %3 = memref.load %arg0[%c3] : memref<4xf32, #tpu.memory_space<smem>>
    %c0_0 = arith.constant 0 : index
    %c0_1 = arith.constant 0 : index
    %4 = vector.load %arg3[%c0_0, %c0_1] : memref<8x512xf32, #tpu.memory_space<vmem>>, vector<8x512xf32>
    %c0_2 = arith.constant 0 : index
    %c0_3 = arith.constant 0 : index
    %5 = vector.load %arg4[%c0_2, %c0_3] : memref<8x512xf32, #tpu.memory_space<vmem>>, vector<8x512xf32>
    %c0_4 = arith.constant 0 : index
    %c0_5 = arith.constant 0 : index
    %6 = vector.load %arg1[%c0_4, %c0_5] : memref<8x8xf32, #tpu.memory_space<vmem>>, vector<8x8xf32>
    %cst = arith.constant dense<0.000000e+00> : vector<8x512xf32>
    %7 = tpu.matmul %6, %4, %cst {dimension_numbers = #tpu.dot_dimension_numbers<[1], [0], [0], [1], [0, 0, 1, 1], [], []>} : vector<8x8xf32>, vector<8x512xf32>, vector<8x512xf32> -> vector<8x512xf32>
    %c0_6 = arith.constant 0 : index
    %c0_7 = arith.constant 0 : index
    %8 = vector.load %arg2[%c0_6, %c0_7] : memref<8x1xf32, #tpu.memory_space<vmem>>, vector<8x1xf32>
    %9 = vector.broadcast %8 : vector<8x1xf32> to vector<8x512xf32>
    %10 = arith.addf %7, %9 : vector<8x512xf32>
    %11 = math.tanh %10 : vector<8x512xf32>
    %cst_8 = arith.constant 0.000000e+00 : f32
    %12 = arith.subf %cst_8, %0 : f32
    %13 = vector.broadcast %12 : f32 to vector<8x512xf32>
    %14 = arith.mulf %13, %11 : vector<8x512xf32>
    %15 = vector.extract_strided_slice %14 {offsets = [0, 0], sizes = [8, 256], strides = [1, 1]} : vector<8x512xf32> to vector<8x256xf32>
    %16 = vector.extract_strided_slice %5 {offsets = [0, 0], sizes = [8, 256], strides = [1, 1]} : vector<8x512xf32> to vector<8x256xf32>
    %17 = arith.mulf %15, %15 : vector<8x256xf32>
    %18 = vector.shape_cast %17 : vector<8x256xf32> to vector<1x8x256xf32>
    %cst_9 = arith.constant dense<0.000000e+00> : vector<1xf32>
    %19 = vector.multi_reduction <add>, %18, %cst_9 [1, 2] : vector<1x8x256xf32> to vector<1xf32>
    %20 = vector.shape_cast %19 : vector<1xf32> to vector<1x1x1xf32>
    %21 = vector.extract %20[0, 0, 0] : f32 from vector<1x1x1xf32>
    %22 = math.sqrt %21 : f32
    %cst_10 = arith.constant 0.000000e+00 : f32
    %23 = arith.addf %cst_10, %22 : f32
    %24 = arith.mulf %16, %16 : vector<8x256xf32>
    %25 = vector.shape_cast %24 : vector<8x256xf32> to vector<1x8x256xf32>
    %cst_11 = arith.constant dense<0.000000e+00> : vector<1xf32>
    %26 = vector.multi_reduction <add>, %25, %cst_11 [1, 2] : vector<1x8x256xf32> to vector<1xf32>
    %27 = vector.shape_cast %26 : vector<1xf32> to vector<1x1x1xf32>
    %28 = vector.extract %27[0, 0, 0] : f32 from vector<1x1x1xf32>
    %29 = math.sqrt %28 : f32
    %cst_12 = arith.constant 0.000000e+00 : f32
    %30 = arith.addf %cst_12, %29 : f32
    %31 = vector.extract_strided_slice %14 {offsets = [0, 256], sizes = [8, 256], strides = [1, 1]} : vector<8x512xf32> to vector<8x256xf32>
    %32 = vector.extract_strided_slice %5 {offsets = [0, 256], sizes = [8, 256], strides = [1, 1]} : vector<8x512xf32> to vector<8x256xf32>
    %33 = arith.mulf %31, %31 : vector<8x256xf32>
    %34 = vector.shape_cast %33 : vector<8x256xf32> to vector<1x8x256xf32>
    %cst_13 = arith.constant dense<0.000000e+00> : vector<1xf32>
    %35 = vector.multi_reduction <add>, %34, %cst_13 [1, 2] : vector<1x8x256xf32> to vector<1xf32>
    %36 = vector.shape_cast %35 : vector<1xf32> to vector<1x1x1xf32>
    %37 = vector.extract %36[0, 0, 0] : f32 from vector<1x1x1xf32>
    %38 = math.sqrt %37 : f32
    %39 = arith.addf %23, %38 : f32
    %40 = arith.mulf %32, %32 : vector<8x256xf32>
    %41 = vector.shape_cast %40 : vector<8x256xf32> to vector<1x8x256xf32>
    %cst_14 = arith.constant dense<0.000000e+00> : vector<1xf32>
    %42 = vector.multi_reduction <add>, %41, %cst_14 [1, 2] : vector<1x8x256xf32> to vector<1xf32>
    %43 = vector.shape_cast %42 : vector<1xf32> to vector<1x1x1xf32>
    %44 = vector.extract %43[0, 0, 0] : f32 from vector<1x1x1xf32>
    %45 = math.sqrt %44 : f32
    %46 = arith.addf %30, %45 : f32
    %cst_15 = arith.constant 2.000000e+00 : f32
    %47 = arith.divf %39, %cst_15 : f32
    %cst_16 = arith.constant 2.000000e+00 : f32
    %48 = arith.divf %46, %cst_16 : f32
    %49 = arith.mulf %2, %48 : f32
    %50 = arith.divf %49, %47 : f32
    %51 = arith.mulf %50, %50 : f32
    %52 = arith.mulf %1, %51 : f32
    %53 = vector.broadcast %52 : f32 to vector<8x512xf32>
    %54 = arith.mulf %53, %14 : vector<8x512xf32>
    %cst_17 = arith.constant 2.000000e+00 : f32
    %55 = arith.mulf %cst_17, %52 : f32
    %56 = math.sqrt %55 : f32
    %57 = vector.broadcast %56 : f32 to vector<8x512xf32>
    %58 = arith.mulf %57, %5 : vector<8x512xf32>
    %59 = arith.addf %54, %58 : vector<8x512xf32>
    %60 = vector.broadcast %3 : f32 to vector<8x512xf32>
    %61 = arith.mulf %60, %59 : vector<8x512xf32>
    %62 = arith.addf %4, %61 : vector<8x512xf32>
    %c0_18 = arith.constant 0 : index
    %c0_19 = arith.constant 0 : index
    %63 = vector.load %arg5[%c0_18, %c0_19] : memref<8x512xf32, #tpu.memory_space<vmem>>, vector<8x512xf32>
    tpu.vector_store %arg5[%c0_18, %c0_19], %62 {strides = array<i32>} : memref<8x512xf32, #tpu.memory_space<vmem>>, vector<8x512xf32>,
    return
  }
}

module attributes {stable_mosaic.version = 11 : i64} {
  func.func @kernel(%arg0: memref<5xf32, #tpu.memory_space<smem>>, %arg1: memref<8x8xf32, #tpu.memory_space<vmem>>, %arg2: memref<8x1xf32, #tpu.memory_space<vmem>>, %arg3: memref<8x512xf32, #tpu.memory_space<vmem>>, %arg4: memref<8x512xf32, #tpu.memory_space<vmem>>, %arg5: memref<8x512xf32, #tpu.memory_space<vmem>>) attributes {dimension_semantics = [], scalar_prefetch = 0 : i64, scratch_operands = 0 : i64, tpu.core_type = #tpu.core_type<tc>} {
    %c0 = arith.constant 0 : index
    %0 = memref.load %arg0[%c0] : memref<5xf32, #tpu.memory_space<smem>>
    %c1 = arith.constant 1 : index
    %1 = memref.load %arg0[%c1] : memref<5xf32, #tpu.memory_space<smem>>
    %c2 = arith.constant 2 : index
    %2 = memref.load %arg0[%c2] : memref<5xf32, #tpu.memory_space<smem>>
    %c3 = arith.constant 3 : index
    %3 = memref.load %arg0[%c3] : memref<5xf32, #tpu.memory_space<smem>>
    %c4 = arith.constant 4 : index
    %4 = memref.load %arg0[%c4] : memref<5xf32, #tpu.memory_space<smem>>
    %c0_0 = arith.constant 0 : index
    %c0_1 = arith.constant 0 : index
    %5 = vector.load %arg3[%c0_0, %c0_1] : memref<8x512xf32, #tpu.memory_space<vmem>>, vector<8x512xf32>
    %c0_2 = arith.constant 0 : index
    %c0_3 = arith.constant 0 : index
    %6 = vector.load %arg1[%c0_2, %c0_3] : memref<8x8xf32, #tpu.memory_space<vmem>>, vector<8x8xf32>
    %cst = arith.constant dense<0.000000e+00> : vector<8x512xf32>
    %7 = tpu.matmul %6, %5, %cst {dimension_numbers = #tpu.dot_dimension_numbers<[1], [0], [0], [1], [0, 0, 1, 1], [], []>} : vector<8x8xf32>, vector<8x512xf32>, vector<8x512xf32> -> vector<8x512xf32>
    %c0_4 = arith.constant 0 : index
    %c0_5 = arith.constant 0 : index
    %8 = vector.load %arg2[%c0_4, %c0_5] : memref<8x1xf32, #tpu.memory_space<vmem>>, vector<8x1xf32>
    %9 = vector.broadcast %8 : vector<8x1xf32> to vector<8x512xf32>
    %10 = arith.addf %7, %9 : vector<8x512xf32>
    %11 = math.tanh %10 : vector<8x512xf32>
    %12 = vector.broadcast %0 : f32 to vector<8x512xf32>
    %13 = arith.mulf %12, %5 : vector<8x512xf32>
    %14 = vector.broadcast %1 : f32 to vector<8x512xf32>
    %15 = arith.mulf %14, %11 : vector<8x512xf32>
    %16 = arith.subf %13, %15 : vector<8x512xf32>
    %17 = vector.broadcast %2 : f32 to vector<8x512xf32>
    %18 = arith.mulf %17, %16 : vector<8x512xf32>
    %19 = vector.broadcast %3 : f32 to vector<8x512xf32>
    %20 = arith.mulf %19, %5 : vector<8x512xf32>
    %21 = arith.addf %18, %20 : vector<8x512xf32>
    %c0_6 = arith.constant 0 : index
    %c0_7 = arith.constant 0 : index
    %22 = vector.load %arg4[%c0_6, %c0_7] : memref<8x512xf32, #tpu.memory_space<vmem>>, vector<8x512xf32>
    %23 = vector.broadcast %4 : f32 to vector<8x512xf32>
    %24 = arith.mulf %23, %22 : vector<8x512xf32>
    %25 = arith.addf %21, %24 : vector<8x512xf32>
    %c0_8 = arith.constant 0 : index
    %c0_9 = arith.constant 0 : index
    %26 = vector.load %arg5[%c0_8, %c0_9] : memref<8x512xf32, #tpu.memory_space<vmem>>, vector<8x512xf32>
    tpu.vector_store %arg5[%c0_8, %c0_9], %25 {strides = array<i32>} : memref<8x512xf32, #tpu.memory_space<vmem>>, vector<8x512xf32>,
    return
  }
}

</mosaic_0001>

<llo_original>
// kernel: closed_call.25
$region0: #{closed_call.25}
  #allocation0 [shape = 'u32[]', space=smem, size = 0x4, offset = 0x4, fixed_abs, tag = 'smem constant byte address 0x4 - core index']
  #allocation1 [shape = 'u32[144,128]{1,0:T(1,128)}', space=vmem, size = 0x12000, scoped, tag = 'internal scratch']
  %s0 = inlined_call_operand.vmem [shape: f32[5], index: 0, kind: input, shape index: {}]
  %s1 = inlined_call_operand.vmem [shape: f32[8,8], index: 1, kind: input, shape index: {}]
  %s2 = inlined_call_operand.vmem [shape: f32[8,1], index: 2, kind: input, shape index: {}]
  %s3 = inlined_call_operand.vmem [shape: f32[8,512], index: 3, kind: input, shape index: {}, may-alias: {3,5}]
  %s4 = inlined_call_operand.vmem [shape: f32[8,512], index: 4, kind: input, shape index: {}]
  %s5 = inlined_call_operand.vmem [shape: f32[8,512], index: 5, kind: output, shape index: {}, may-alias: {3,5}]
  %s6 = sld [smem:[#allocation0]]
  $region34: #{closed_call.25} parent=0
    _
  %s8 = ssub.s32 1, %s6
  %s9 = scalar_select 0, %s8, %s6
  $region1: #{closed_call.25} parent=0
    #allocation2 [shape = 'u8[512]{0}', space=smem, size = 0x200, scoped, tag = 'input window, operand 0, single buffered']
    #allocation3 [shape = 's32[1]{0}', space=sflag, size = 0x4, scoped, tag = 'scoped memory for closed_call.25']
    %10 = vsyncpa [#allocation3], 0
    // Predicated region
    $region2: #{closed_call.25} parent=1 // pred_check
      _
    $region3: #{closed_call.25} parent=1 // pred_check_branch
      %12 = sbr.rel (0) target = $region5
    $region4: #{closed_call.25} parent=1 // pred_region
      %s14 = ssub.s32 16, 16
      %15 = vsyncadd [#allocation3], %s14
      %s17 = sshll.u32 %s0, 4
      %s18 = int_to_ptr.vmem [resolvable:$true] %s17
      %20 = dma.vmem_to_smem %s18, 16, [#allocation2], [#allocation3]
    $region5: #{closed_call.25} parent=1 // pred_fallthru
      _
    // Predicated region
    $region6: #{closed_call.25} parent=1 // pred_check
      _
    $region7: #{closed_call.25} parent=1 // pred_check_branch
      %22 = sbr.rel (0) target = $region9
    $region8: #{closed_call.25} parent=1 // pred_region
      _
    $region9: #{closed_call.25} parent=1 // pred_fallthru
      _
    // Predicated region
    $region10: #{closed_call.25} parent=1 // pred_check
      _
    $region11: #{closed_call.25} parent=1 // pred_check_branch
      %24 = sbr.rel (0) target = $region13
    $region12: #{closed_call.25} parent=1 // pred_region
      _
    $region13: #{closed_call.25} parent=1 // pred_fallthru
      _
    // Predicated region
    $region14: #{closed_call.25} parent=1 // pred_check
      _
    $region15: #{closed_call.25} parent=1 // pred_check_branch
      %26 = sbr.rel (0) target = $region17
    $region16: #{closed_call.25} parent=1 // pred_region
      _
    $region17: #{closed_call.25} parent=1 // pred_fallthru
      _
    // Predicated region
    $region18: #{closed_call.25} parent=1 // pred_check
      _
    $region19: #{closed_call.25} parent=1 // pred_check_branch
      %28 = sbr.rel (0) target = $region21
    $region20: #{closed_call.25} parent=1 // pred_region
      _
    $region21: #{closed_call.25} parent=1 // pred_fallthru
      _
    // Predicated region
    $region22: #{closed_call.25} parent=1 // pred_check
      _
    $region23: #{closed_call.25} parent=1 // pred_check_branch
      %30 = sbr.rel (0) target = $region25
    $region24: #{closed_call.25} parent=1 // pred_region
      %31 = dma.done [#allocation3], 16
    $region25: #{closed_call.25} parent=1 // pred_fallthru
      _
    %32 = sfence
    %s33 = sld [smem:[#allocation2]]
    %s34 = sld [smem:[#allocation2 + $0x1]]
    %s35 = sld [smem:[#allocation2 + $0x2]]
    %s36 = sld [smem:[#allocation2 + $0x3]]
    %s37 = sld [smem:[#allocation2 + $0x4]]
    %v38 = vld [vmem:[%s3] sm:$0xff]
    %v39 = vld [vmem:[%s3 + $0x8] sm:$0xff]
    %v40 = vld [vmem:[%s3 + $0x10] sm:$0xff]
    %v41 = vld [vmem:[%s3 + $0x18] sm:$0xff]
    %v42 = vld [vmem:[%s1] sm:$0xff]
    %v43 = vld [vmem:[%s2] sm:$0xff]
    %45 = vset.pattern.permute.xlu0 0
    %46 = vperm.xlu0 %45, %v43
    %v47 = vpop.permute.xlu0 %46
    %vm49 = vcmask 64512
    %v51 = vsel %vm49, %v42, 0
    %53 = vmatprep.subr.mxu0 0.0
    %54 = vmatpush1.msra.mxu0 0.0
    %55 = vmatprep.subr.mxu0 0.0
    %56 = vmatpush1.msra.mxu0 0.0
    %57 = vmatprep.subr.mxu0 0.0
    %58 = vmatpush1.msra.mxu0 0.0
    %59 = vmatprep.subr.mxu0 0.0
    %60 = vmatpush1.msra.mxu0 0.0
    %61 = vmatprep.subr.mxu0 0.0
    %62 = vmatpush1.msra.mxu0 0.0
    %63 = vmatprep.subr.mxu0 0.0
    %64 = vmatpush1.msra.mxu0 0.0
    %65 = vmatprep.subr.mxu0 0.0
    %66 = vmatpush1.msra.mxu0 0.0
    %67 = vmatprep.subr.mxu0 0.0
    %68 = vmatpush1.msra.mxu0 0.0
    %69 = vmatprep.subr.mxu0 0.0
    %70 = vmatpush1.msra.mxu0 0.0
    %71 = vmatprep.subr.mxu0 0.0
    %72 = vmatpush1.msra.mxu0 0.0
    %73 = vmatprep.subr.mxu0 0.0
    %74 = vmatpush1.msra.mxu0 0.0
    %75 = vmatprep.subr.mxu0 0.0
    %76 = vmatpush1.msra.mxu0 0.0
    %77 = vmatprep.subr.mxu0 0.0
    %78 = vmatpush1.msra.mxu0 0.0
    %79 = vmatprep.subr.mxu0 0.0
    %80 = vmatpush1.msra.mxu0 0.0
    %81 = vmatprep.subr.mxu0 0.0
    %82 = vmatpush1.msra.mxu0 0.0
    %83 = vmatprep.subr.mxu0 %v39
    %84 = vmatpush1.msra.mxu0 %v38
    %85 = vmatprep.subr.mxu0 0.0
    %86 = vmatpush2.msra.mxu0 0.0
    %87 = vmatprep.subr.mxu0 0.0
    %88 = vmatpush2.msra.mxu0 0.0
    %89 = vmatprep.subr.mxu0 0.0
    %90 = vmatpush2.msra.mxu0 0.0
    %91 = vmatprep.subr.mxu0 0.0
    %92 = vmatpush2.msra.mxu0 0.0
    %93 = vmatprep.subr.mxu0 0.0
    %94 = vmatpush2.msra.mxu0 0.0
    %95 = vmatprep.subr.mxu0 0.0
    %96 = vmatpush2.msra.mxu0 0.0
    %97 = vmatprep.subr.mxu0 0.0
    %98 = vmatpush2.msra.mxu0 0.0
    %99 = vmatprep.subr.mxu0 0.0
    %100 = vmatpush2.msra.mxu0 0.0
    %101 = vmatprep.subr.mxu0 0.0
    %102 = vmatpush2.msra.mxu0 0.0
    %103 = vmatprep.subr.mxu0 0.0
    %104 = vmatpush2.msra.mxu0 0.0
    %105 = vmatprep.subr.mxu0 0.0
    %106 = vmatpush2.msra.mxu0 0.0
    %107 = vmatprep.subr.mxu0 0.0
    %108 = vmatpush2.msra.mxu0 0.0
    %109 = vmatprep.subr.mxu0 0.0
    %110 = vmatpush2.msra.mxu0 0.0
    %111 = vmatprep.subr.mxu0 0.0
    %112 = vmatpush2.msra.mxu0 0.0
    %113 = vmatprep.subr.mxu0 0.0
    %114 = vmatpush2.msra.mxu0 0.0
    %115 = vmatprep.subr.mxu0 0.0
    %116 = vmatpush2.msra.mxu0 0.0
    %117 = vmatprep.mubr.f32.mxu0 0.0
    %118 = vmatmul.mubr.f32.gmra.mxu0 %v51
    %v119 = vpop.f32.mrf.mxu0
    %v120 = vadd.f32 %v47, %v119
    %v121 = vpop.f32.mrf.mxu0
    %v122 = vadd.f32 %v47, %v121
    %123 = vdwg.mxu0
    %124 = vmatprep.subr.mxu0 0.0
    %125 = vmatpush1.msra.mxu0 0.0
    %126 = vmatprep.subr.mxu0 0.0
    %127 = vmatpush1.msra.mxu0 0.0
    %128 = vmatprep.subr.mxu0 0.0
    %129 = vmatpush1.msra.mxu0 0.0
    %130 = vmatprep.subr.mxu0 0.0
    %131 = vmatpush1.msra.mxu0 0.0
    %132 = vmatprep.subr.mxu0 0.0
    %133 = vmatpush1.msra.mxu0 0.0
    %134 = vmatprep.subr.mxu0 0.0
    %135 = vmatpush1.msra.mxu0 0.0
    %136 = vmatprep.subr.mxu0 0.0
    %137 = vmatpush1.msra.mxu0 0.0
    %138 = vmatprep.subr.mxu0 0.0
    %139 = vmatpush1.msra.mxu0 0.0
    %140 = vmatprep.subr.mxu0 0.0
    %141 = vmatpush1.msra.mxu0 0.0
    %142 = vmatprep.subr.mxu0 0.0
    %143 = vmatpush1.msra.mxu0 0.0
    %144 = vmatprep.subr.mxu0 0.0
    %145 = vmatpush1.msra.mxu0 0.0
    %146 = vmatprep.subr.mxu0 0.0
    %147 = vmatpush1.msra.mxu0 0.0
    %148 = vmatprep.subr.mxu0 0.0
    %149 = vmatpush1.msra.mxu0 0.0
    %150 = vmatprep.subr.mxu0 0.0
    %151 = vmatpush1.msra.mxu0 0.0
    %152 = vmatprep.subr.mxu0 0.0
    %153 = vmatpush1.msra.mxu0 0.0
    %154 = vmatprep.subr.mxu0 %v41
    %155 = vmatpush1.msra.mxu0 %v40
    %156 = vmatprep.subr.mxu0 0.0
    %157 = vmatpush2.msra.mxu0 0.0
    %158 = vmatprep.subr.mxu0 0.0
    %159 = vmatpush2.msra.mxu0 0.0
    %160 = vmatprep.subr.mxu0 0.0
    %161 = vmatpush2.msra.mxu0 0.0
    %162 = vmatprep.subr.mxu0 0.0
    %163 = vmatpush2.msra.mxu0 0.0
    %164 = vmatprep.subr.mxu0 0.0
    %165 = vmatpush2.msra.mxu0 0.0
    %166 = vmatprep.subr.mxu0 0.0
    %167 = vmatpush2.msra.mxu0 0.0
    %168 = vmatprep.subr.mxu0 0.0
    %169 = vmatpush2.msra.mxu0 0.0
    %170 = vmatprep.subr.mxu0 0.0
    %171 = vmatpush2.msra.mxu0 0.0
    %172 = vmatprep.subr.mxu0 0.0
    %173 = vmatpush2.msra.mxu0 0.0
    %174 = vmatprep.subr.mxu0 0.0
    %175 = vmatpush2.msra.mxu0 0.0
    %176 = vmatprep.subr.mxu0 0.0
    %177 = vmatpush2.msra.mxu0 0.0
    %178 = vmatprep.subr.mxu0 0.0
    %179 = vmatpush2.msra.mxu0 0.0
    %180 = vmatprep.subr.mxu0 0.0
    %181 = vmatpush2.msra.mxu0 0.0
    %182 = vmatprep.subr.mxu0 0.0
    %183 = vmatpush2.msra.mxu0 0.0
    %184 = vmatprep.subr.mxu0 0.0
    %185 = vmatpush2.msra.mxu0 0.0
    %186 = vmatprep.subr.mxu0 0.0
    %187 = vmatpush2.msra.mxu0 0.0
    %188 = vmatprep.mubr.f32.mxu0 0.0
    %189 = vmatmul.mubr.f32.gmra.mxu0 %v51
    %v190 = vpop.f32.mrf.mxu0
    %v191 = vadd.f32 %v47, %v190
    %v192 = vpop.f32.mrf.mxu0
    %v193 = vadd.f32 %v47, %v192
    %194 = vdwg.mxu0
    %v195 = vtanh.pop %v120
    %v196 = vtanh.pop %v122
    %v197 = vtanh.pop %v191
    %v198 = vtanh.pop %v193
    %v199 = vstv %s33
    %v200 = vmul.f32 %v199, %v38
    %v201 = vmul.f32 %v199, %v39
    %v202 = vmul.f32 %v199, %v40
    %v203 = vmul.f32 %v199, %v41
    %v204 = vstv %s34
    %v205 = vmul.f32 %v204, %v195
    %v206 = vmul.f32 %v204, %v196
    %v207 = vmul.f32 %v204, %v197
    %v208 = vmul.f32 %v204, %v198
    %v209 = vsub.f32 %v200, %v205
    %v210 = vsub.f32 %v201, %v206
    %v211 = vsub.f32 %v202, %v207
    %v212 = vsub.f32 %v203, %v208
    %v213 = vstv %s35
    %v214 = vmul.f32 %v213, %v209
    %v215 = vmul.f32 %v213, %v210
    %v216 = vmul.f32 %v213, %v211
    %v217 = vmul.f32 %v213, %v212
    %v218 = vstv %s36
    %v219 = vmul.f32 %v218, %v38
    %v220 = vmul.f32 %v218, %v39
    %v221 = vmul.f32 %v218, %v40
    %v222 = vmul.f32 %v218, %v41
    %v223 = vadd.f32 %v214, %v219
    %v224 = vadd.f32 %v215, %v220
    %v225 = vadd.f32 %v216, %v221
    %v226 = vadd.f32 %v217, %v222
    %v227 = vld [vmem:[%s4] sm:$0xff]
    %v228 = vld [vmem:[%s4 + $0x8] sm:$0xff]
    %v229 = vld [vmem:[%s4 + $0x10] sm:$0xff]
    %v230 = vld [vmem:[%s4 + $0x18] sm:$0xff]
    %v231 = vstv %s37
    %v232 = vmul.f32 %v231, %v227
    %v233 = vmul.f32 %v231, %v228
    %v234 = vmul.f32 %v231, %v229
    %v235 = vmul.f32 %v231, %v230
    %v236 = vadd.f32 %v223, %v232
    %v237 = vadd.f32 %v224, %v233
    %v238 = vadd.f32 %v225, %v234
    %v239 = vadd.f32 %v226, %v235
    %240 = vst [vmem:[%s5] sm:$0xff] %v236
    %241 = vst [vmem:[%s5 + $0x8] sm:$0xff] %v237
    %242 = vst [vmem:[%s5 + $0x10] sm:$0xff] %v238
    %243 = vst [vmem:[%s5 + $0x18] sm:$0xff] %v239
    // Predicated region
    $region26: #{closed_call.25} parent=1 // pred_check
      _
    $region27: #{closed_call.25} parent=1 // pred_check_branch
      %245 = sbr.rel (0) target = $region29
    $region28: #{closed_call.25} parent=1 // pred_region
      _
    $region29: #{closed_call.25} parent=1 // pred_fallthru
      _
    // Predicated region
    $region30: #{closed_call.25} parent=1 // pred_check
      _
    $region31: #{closed_call.25} parent=1 // pred_check_branch
      %247 = sbr.rel (0) target = $region33
    $region32: #{closed_call.25} parent=1 // pred_region
      _
    $region33: #{closed_call.25} parent=1 // pred_fallthru
      _
    %248 = vsyncpa [#allocation3], 1

// kernel: closed_call.26
$region0: #{closed_call.26}
  #allocation0 [shape = 'u32[]', space=smem, size = 0x4, offset = 0x4, fixed_abs, tag = 'smem constant byte address 0x4 - core index']
  #allocation1 [shape = 'u32[144,128]{1,0:T(1,128)}', space=vmem, size = 0x12000, scoped, tag = 'internal scratch']
  %s0 = inlined_call_operand.vmem [shape: f32[4], index: 0, kind: input, shape index: {}]
  %s1 = inlined_call_operand.vmem [shape: f32[8,8], index: 1, kind: input, shape index: {}]
  %s2 = inlined_call_operand.vmem [shape: f32[8,1], index: 2, kind: input, shape index: {}]
  %s3 = inlined_call_operand.vmem [shape: f32[8,512], index: 3, kind: input, shape index: {}, may-alias: {3,5}]
  %s4 = inlined_call_operand.vmem [shape: f32[8,512], index: 4, kind: input, shape index: {}]
  %s5 = inlined_call_operand.vmem [shape: f32[8,512], index: 5, kind: output, shape index: {}, may-alias: {3,5}]
  %s6 = sld [smem:[#allocation0]]
  $region34: #{closed_call.26} parent=0
    _
  %s8 = ssub.s32 1, %s6
  %s9 = scalar_select 0, %s8, %s6
  $region1: #{closed_call.26} parent=0
    #allocation2 [shape = 'u8[512]{0}', space=smem, size = 0x200, scoped, tag = 'input window, operand 0, single buffered']
    #allocation3 [shape = 's32[1]{0}', space=sflag, size = 0x4, scoped, tag = 'scoped memory for closed_call.26']
    %10 = vsyncpa [#allocation3], 0
    // Predicated region
    $region2: #{closed_call.26} parent=1 // pred_check
      _
    $region3: #{closed_call.26} parent=1 // pred_check_branch
      %12 = sbr.rel (0) target = $region5
    $region4: #{closed_call.26} parent=1 // pred_region
      %s14 = ssub.s32 16, 16
      %15 = vsyncadd [#allocation3], %s14
      %s17 = sshll.u32 %s0, 4
      %s18 = int_to_ptr.vmem [resolvable:$true] %s17
      %20 = dma.vmem_to_smem %s18, 16, [#allocation2], [#allocation3]
    $region5: #{closed_call.26} parent=1 // pred_fallthru
      _
    // Predicated region
    $region6: #{closed_call.26} parent=1 // pred_check
      _
    $region7: #{closed_call.26} parent=1 // pred_check_branch
      %22 = sbr.rel (0) target = $region9
    $region8: #{closed_call.26} parent=1 // pred_region
      _
    $region9: #{closed_call.26} parent=1 // pred_fallthru
      _
    // Predicated region
    $region10: #{closed_call.26} parent=1 // pred_check
      _
    $region11: #{closed_call.26} parent=1 // pred_check_branch
      %24 = sbr.rel (0) target = $region13
    $region12: #{closed_call.26} parent=1 // pred_region
      _
    $region13: #{closed_call.26} parent=1 // pred_fallthru
      _
    // Predicated region
    $region14: #{closed_call.26} parent=1 // pred_check
      _
    $region15: #{closed_call.26} parent=1 // pred_check_branch
      %26 = sbr.rel (0) target = $region17
    $region16: #{closed_call.26} parent=1 // pred_region
      _
    $region17: #{closed_call.26} parent=1 // pred_fallthru
      _
    // Predicated region
    $region18: #{closed_call.26} parent=1 // pred_check
      _
    $region19: #{closed_call.26} parent=1 // pred_check_branch
      %28 = sbr.rel (0) target = $region21
    $region20: #{closed_call.26} parent=1 // pred_region
      _
    $region21: #{closed_call.26} parent=1 // pred_fallthru
      _
    // Predicated region
    $region22: #{closed_call.26} parent=1 // pred_check
      _
    $region23: #{closed_call.26} parent=1 // pred_check_branch
      %30 = sbr.rel (0) target = $region25
    $region24: #{closed_call.26} parent=1 // pred_region
      %31 = dma.done [#allocation3], 16
    $region25: #{closed_call.26} parent=1 // pred_fallthru
      _
    %32 = sfence
    %s33 = sld [smem:[#allocation2]]
    %s34 = sld [smem:[#allocation2 + $0x1]]
    %s35 = sld [smem:[#allocation2 + $0x2]]
    %s36 = sld [smem:[#allocation2 + $0x3]]
    %v37 = vld [vmem:[%s3] sm:$0xff]
    %v38 = vld [vmem:[%s3 + $0x8] sm:$0xff]
    %v39 = vld [vmem:[%s3 + $0x10] sm:$0xff]
    %v40 = vld [vmem:[%s3 + $0x18] sm:$0xff]
    %v41 = vld [vmem:[%s4] sm:$0xff]
    %v42 = vld [vmem:[%s4 + $0x8] sm:$0xff]
    %v43 = vld [vmem:[%s4 + $0x10] sm:$0xff]
    %v44 = vld [vmem:[%s4 + $0x18] sm:$0xff]
    %v45 = vld [vmem:[%s1] sm:$0xff]
    %v46 = vld [vmem:[%s2] sm:$0xff]
    %48 = vset.pattern.permute.xlu0 0
    %49 = vperm.xlu0 %48, %v46
    %v50 = vpop.permute.xlu0 %49
    %vm52 = vcmask 64512
    %v54 = vsel %vm52, %v45, 0
    %56 = vmatprep.subr.mxu0 0.0
    %57 = vmatpush1.msra.mxu0 0.0
    %58 = vmatprep.subr.mxu0 0.0
    %59 = vmatpush1.msra.mxu0 0.0
    %60 = vmatprep.subr.mxu0 0.0
    %61 = vmatpush1.msra.mxu0 0.0
    %62 = vmatprep.subr.mxu0 0.0
    %63 = vmatpush1.msra.mxu0 0.0
    %64 = vmatprep.subr.mxu0 0.0
    %65 = vmatpush1.msra.mxu0 0.0
    %66 = vmatprep.subr.mxu0 0.0
    %67 = vmatpush1.msra.mxu0 0.0
    %68 = vmatprep.subr.mxu0 0.0
    %69 = vmatpush1.msra.mxu0 0.0
    %70 = vmatprep.subr.mxu0 0.0
    %71 = vmatpush1.msra.mxu0 0.0
    %72 = vmatprep.subr.mxu0 0.0
    %73 = vmatpush1.msra.mxu0 0.0
    %74 = vmatprep.subr.mxu0 0.0
    %75 = vmatpush1.msra.mxu0 0.0
    %76 = vmatprep.subr.mxu0 0.0
    %77 = vmatpush1.msra.mxu0 0.0
    %78 = vmatprep.subr.mxu0 0.0
    %79 = vmatpush1.msra.mxu0 0.0
    %80 = vmatprep.subr.mxu0 0.0
    %81 = vmatpush1.msra.mxu0 0.0
    %82 = vmatprep.subr.mxu0 0.0
    %83 = vmatpush1.msra.mxu0 0.0
    %84 = vmatprep.subr.mxu0 0.0
    %85 = vmatpush1.msra.mxu0 0.0
    %86 = vmatprep.subr.mxu0 %v38
    %87 = vmatpush1.msra.mxu0 %v37
    %88 = vmatprep.subr.mxu0 0.0
    %89 = vmatpush2.msra.mxu0 0.0
    %90 = vmatprep.subr.mxu0 0.0
    %91 = vmatpush2.msra.mxu0 0.0
    %92 = vmatprep.subr.mxu0 0.0
    %93 = vmatpush2.msra.mxu0 0.0
    %94 = vmatprep.subr.mxu0 0.0
    %95 = vmatpush2.msra.mxu0 0.0
    %96 = vmatprep.subr.mxu0 0.0
    %97 = vmatpush2.msra.mxu0 0.0
    %98 = vmatprep.subr.mxu0 0.0
    %99 = vmatpush2.msra.mxu0 0.0
    %100 = vmatprep.subr.mxu0 0.0
    %101 = vmatpush2.msra.mxu0 0.0
    %102 = vmatprep.subr.mxu0 0.0
    %103 = vmatpush2.msra.mxu0 0.0
    %104 = vmatprep.subr.mxu0 0.0
    %105 = vmatpush2.msra.mxu0 0.0
    %106 = vmatprep.subr.mxu0 0.0
    %107 = vmatpush2.msra.mxu0 0.0
    %108 = vmatprep.subr.mxu0 0.0
    %109 = vmatpush2.msra.mxu0 0.0
    %110 = vmatprep.subr.mxu0 0.0
    %111 = vmatpush2.msra.mxu0 0.0
    %112 = vmatprep.subr.mxu0 0.0
    %113 = vmatpush2.msra.mxu0 0.0
    %114 = vmatprep.subr.mxu0 0.0
    %115 = vmatpush2.msra.mxu0 0.0
    %116 = vmatprep.subr.mxu0 0.0
    %117 = vmatpush2.msra.mxu0 0.0
    %118 = vmatprep.subr.mxu0 0.0
    %119 = vmatpush2.msra.mxu0 0.0
    %120 = vmatprep.mubr.f32.mxu0 0.0
    %121 = vmatmul.mubr.f32.gmra.mxu0 %v54
    %v122 = vpop.f32.mrf.mxu0
    %v123 = vadd.f32 %v50, %v122
    %v124 = vpop.f32.mrf.mxu0
    %v125 = vadd.f32 %v50, %v124
    %126 = vdwg.mxu0
    %127 = vmatprep.subr.mxu0 0.0
    %128 = vmatpush1.msra.mxu0 0.0
    %129 = vmatprep.subr.mxu0 0.0
    %130 = vmatpush1.msra.mxu0 0.0
    %131 = vmatprep.subr.mxu0 0.0
    %132 = vmatpush1.msra.mxu0 0.0
    %133 = vmatprep.subr.mxu0 0.0
    %134 = vmatpush1.msra.mxu0 0.0
    %135 = vmatprep.subr.mxu0 0.0
    %136 = vmatpush1.msra.mxu0 0.0
    %137 = vmatprep.subr.mxu0 0.0
    %138 = vmatpush1.msra.mxu0 0.0
    %139 = vmatprep.subr.mxu0 0.0
    %140 = vmatpush1.msra.mxu0 0.0
    %141 = vmatprep.subr.mxu0 0.0
    %142 = vmatpush1.msra.mxu0 0.0
    %143 = vmatprep.subr.mxu0 0.0
    %144 = vmatpush1.msra.mxu0 0.0
    %145 = vmatprep.subr.mxu0 0.0
    %146 = vmatpush1.msra.mxu0 0.0
    %147 = vmatprep.subr.mxu0 0.0
    %148 = vmatpush1.msra.mxu0 0.0
    %149 = vmatprep.subr.mxu0 0.0
    %150 = vmatpush1.msra.mxu0 0.0
    %151 = vmatprep.subr.mxu0 0.0
    %152 = vmatpush1.msra.mxu0 0.0
    %153 = vmatprep.subr.mxu0 0.0
    %154 = vmatpush1.msra.mxu0 0.0
    %155 = vmatprep.subr.mxu0 0.0
    %156 = vmatpush1.msra.mxu0 0.0
    %157 = vmatprep.subr.mxu0 %v40
    %158 = vmatpush1.msra.mxu0 %v39
    %159 = vmatprep.subr.mxu0 0.0
    %160 = vmatpush2.msra.mxu0 0.0
    %161 = vmatprep.subr.mxu0 0.0
    %162 = vmatpush2.msra.mxu0 0.0
    %163 = vmatprep.subr.mxu0 0.0
    %164 = vmatpush2.msra.mxu0 0.0
    %165 = vmatprep.subr.mxu0 0.0
    %166 = vmatpush2.msra.mxu0 0.0
    %167 = vmatprep.subr.mxu0 0.0
    %168 = vmatpush2.msra.mxu0 0.0
    %169 = vmatprep.subr.mxu0 0.0
    %170 = vmatpush2.msra.mxu0 0.0
    %171 = vmatprep.subr.mxu0 0.0
    %172 = vmatpush2.msra.mxu0 0.0
    %173 = vmatprep.subr.mxu0 0.0
    %174 = vmatpush2.msra.mxu0 0.0
    %175 = vmatprep.subr.mxu0 0.0
    %176 = vmatpush2.msra.mxu0 0.0
    %177 = vmatprep.subr.mxu0 0.0
    %178 = vmatpush2.msra.mxu0 0.0
    %179 = vmatprep.subr.mxu0 0.0
    %180 = vmatpush2.msra.mxu0 0.0
    %181 = vmatprep.subr.mxu0 0.0
    %182 = vmatpush2.msra.mxu0 0.0
    %183 = vmatprep.subr.mxu0 0.0
    %184 = vmatpush2.msra.mxu0 0.0
    %185 = vmatprep.subr.mxu0 0.0
    %186 = vmatpush2.msra.mxu0 0.0
    %187 = vmatprep.subr.mxu0 0.0
    %188 = vmatpush2.msra.mxu0 0.0
    %189 = vmatprep.subr.mxu0 0.0
    %190 = vmatpush2.msra.mxu0 0.0
    %191 = vmatprep.mubr.f32.mxu0 0.0
    %192 = vmatmul.mubr.f32.gmra.mxu0 %v54
    %v193 = vpop.f32.mrf.mxu0
    %v194 = vadd.f32 %v50, %v193
    %v195 = vpop.f32.mrf.mxu0
    %v196 = vadd.f32 %v50, %v195
    %197 = vdwg.mxu0
    %v198 = vtanh.pop %v123
    %v199 = vtanh.pop %v125
    %v200 = vtanh.pop %v194
    %v201 = vtanh.pop %v196
    %s202 = ssub.f32 0.0, %s33
    %v203 = vstv %s202
    %v204 = vmul.f32 %v203, %v198
    %v205 = vmul.f32 %v203, %v199
    %v206 = vmul.f32 %v203, %v200
    %v207 = vmul.f32 %v203, %v201
    %v208 = vmul.f32 %v204, %v204
    %v209 = vmul.f32 %v205, %v205
    %v210 = vadd.f32 %v208, %v209
    %211 = vadd.xlane.f32.xlu0 %v210
    %v212 = vpop.xlane.xlu0 %211
    %v213 = vrot.slane %v212, 4
    %v214 = vadd.f32 %v212, %v213
    %v215 = vrot.slane %v214, 2
    %v216 = vadd.f32 %v214, %v215
    %v217 = vrot.slane %v216, 1
    %v218 = vadd.f32 %v216, %v217
    %s219 = vtos %v218
    %v220 = vstv %s219
    %v221 = vrsqrt.pop %v220
    %v222 = vmul.f32 %v220, %v221
    %vm223 = vcmp.eq.f32.partialorder %v220, inf
    %v224 = vsel %vm223, %v220, %v222
    %vm225 = vcmp.eq.f32.partialorder %v220, 0.0
    %v226 = vand.u32 %v220, 2147483648
    %v227 = vsel %vm225, %v226, %v224
    %s228 = vtos %v227
    %s229 = sadd.f32 %s228, 0.0
    %v230 = vmul.f32 %v41, %v41
    %v231 = vmul.f32 %v42, %v42
    %v232 = vadd.f32 %v230, %v231
    %233 = vadd.xlane.f32.xlu0 %v232
    %v234 = vpop.xlane.xlu0 %233
    %v235 = vrot.slane %v234, 4
    %v236 = vadd.f32 %v234, %v235
    %v237 = vrot.slane %v236, 2
    %v238 = vadd.f32 %v236, %v237
    %v239 = vrot.slane %v238, 1
    %v240 = vadd.f32 %v238, %v239
    %s241 = vtos %v240
    %v242 = vstv %s241
    %v243 = vrsqrt.pop %v242
    %v244 = vmul.f32 %v242, %v243
    %vm245 = vcmp.eq.f32.partialorder %v242, inf
    %v246 = vsel %vm245, %v242, %v244
    %vm247 = vcmp.eq.f32.partialorder %v242, 0.0
    %v248 = vand.u32 %v242, 2147483648
    %v249 = vsel %vm247, %v248, %v246
    %s250 = vtos %v249
    %s251 = sadd.f32 %s250, 0.0
    %v252 = vmul.f32 %v206, %v206
    %v253 = vmul.f32 %v207, %v207
    %v254 = vadd.f32 %v252, %v253
    %255 = vadd.xlane.f32.xlu0 %v254
    %v256 = vpop.xlane.xlu0 %255
    %v257 = vrot.slane %v256, 4
    %v258 = vadd.f32 %v256, %v257
    %v259 = vrot.slane %v258, 2
    %v260 = vadd.f32 %v258, %v259
    %v261 = vrot.slane %v260, 1
    %v262 = vadd.f32 %v260, %v261
    %s263 = vtos %v262
    %v264 = vstv %s263
    %v265 = vrsqrt.pop %v264
    %v266 = vmul.f32 %v264, %v265
    %vm267 = vcmp.eq.f32.partialorder %v264, inf
    %v268 = vsel %vm267, %v264, %v266
    %vm269 = vcmp.eq.f32.partialorder %v264, 0.0
    %v270 = vand.u32 %v264, 2147483648
    %v271 = vsel %vm269, %v270, %v268
    %s272 = vtos %v271
    %s273 = sadd.f32 %s229, %s272
    %v274 = vmul.f32 %v43, %v43
    %v275 = vmul.f32 %v44, %v44
    %v276 = vadd.f32 %v274, %v275
    %277 = vadd.xlane.f32.xlu0 %v276
    %v278 = vpop.xlane.xlu0 %277
    %v279 = vrot.slane %v278, 4
    %v280 = vadd.f32 %v278, %v279
    %v281 = vrot.slane %v280, 2
    %v282 = vadd.f32 %v280, %v281
    %v283 = vrot.slane %v282, 1
    %v284 = vadd.f32 %v282, %v283
    %s285 = vtos %v284
    %v286 = vstv %s285
    %v287 = vrsqrt.pop %v286
    %v288 = vmul.f32 %v286, %v287
    %vm289 = vcmp.eq.f32.partialorder %v286, inf
    %v290 = vsel %vm289, %v286, %v288
    %vm291 = vcmp.eq.f32.partialorder %v286, 0.0
    %v292 = vand.u32 %v286, 2147483648
    %v293 = vsel %vm291, %v292, %v290
    %s294 = vtos %v293
    %s295 = sadd.f32 %s251, %s294
    %v296 = vrcp.pop 2.0
    %s297 = vtos %v296
    %s298 = smul.f32 %s273, %s297
    %v299 = vrcp.pop 2.0
    %s300 = vtos %v299
    %s301 = smul.f32 %s295, %s300
    %s302 = smul.f32 %s35, %s301
    %v303 = vstv %s298
    %v304 = vrcp.pop %v303
    %s305 = vtos %v304
    %s306 = smul.f32 %s302, %s305
    %s307 = smul.f32 %s306, %s306
    %s308 = smul.f32 %s34, %s307
    %v309 = vstv %s308
    %v310 = vmul.f32 %v309, %v204
    %v311 = vmul.f32 %v309, %v205
    %v312 = vmul.f32 %v309, %v206
    %v313 = vmul.f32 %v309, %v207
    %s314 = smul.f32 %s308, 2.0
    %v315 = vstv %s314
    %v316 = vrsqrt.pop %v315
    %v317 = vmul.f32 %v315, %v316
    %vm318 = vcmp.eq.f32.partialorder %v315, inf
    %v319 = vsel %vm318, %v315, %v317
    %vm320 = vcmp.eq.f32.partialorder %v315, 0.0
    %v321 = vand.u32 %v315, 2147483648
    %v322 = vsel %vm320, %v321, %v319
    %s323 = vtos %v322
    %v324 = vstv %s323
    %v325 = vmul.f32 %v324, %v41
    %v326 = vmul.f32 %v324, %v42
    %v327 = vmul.f32 %v324, %v43
    %v328 = vmul.f32 %v324, %v44
    %v329 = vadd.f32 %v310, %v325
    %v330 = vadd.f32 %v311, %v326
    %v331 = vadd.f32 %v312, %v327
    %v332 = vadd.f32 %v313, %v328
    %v333 = vstv %s36
    %v334 = vmul.f32 %v333, %v329
    %v335 = vmul.f32 %v333, %v330
    %v336 = vmul.f32 %v333, %v331
    %v337 = vmul.f32 %v333, %v332
    %v338 = vadd.f32 %v37, %v334
    %v339 = vadd.f32 %v38, %v335
    %v340 = vadd.f32 %v39, %v336
    %v341 = vadd.f32 %v40, %v337
    %342 = vst [vmem:[%s5] sm:$0xff] %v338
    %343 = vst [vmem:[%s5 + $0x8] sm:$0xff] %v339
    %344 = vst [vmem:[%s5 + $0x10] sm:$0xff] %v340
    %345 = vst [vmem:[%s5 + $0x18] sm:$0xff] %v341
    // Predicated region
    $region26: #{closed_call.26} parent=1 // pred_check
      _
    $region27: #{closed_call.26} parent=1 // pred_check_branch
      %347 = sbr.rel (0) target = $region29
    $region28: #{closed_call.26} parent=1 // pred_region
      _
    $region29: #{closed_call.26} parent=1 // pred_fallthru
      _
    // Predicated region
    $region30: #{closed_call.26} parent=1 // pred_check
      _
    $region31: #{closed_call.26} parent=1 // pred_check_branch
      %349 = sbr.rel (0) target = $region33
    $region32: #{closed_call.26} parent=1 // pred_region
      _
    $region33: #{closed_call.26} parent=1 // pred_fallthru
      _
    %350 = vsyncpa [#allocation3], 1

</llo_original>
